<compile_context>
chip_gen: v5e
topology: v5e:2x2
jax: 0.10.0
libtpu: 0.0.40
codegen_flags: <defaults>
</compile_context>

<pallas_src>
import functools

import jax
import jax.numpy as jnp
import numpy as np
from jax import lax
from jax.experimental import pallas as pl
from jax.experimental.pallas import tpu as pltpu


def _round_up(x, m):
    return ((x + m - 1) // m) * m


def _sage_layer_kernel(adj_ref, xs_ref, xd_ref, w_ref, b_ref, out_ref, acc_ref,
                       *, apply_act):
    """One grid step of a tiled SAGEConv layer.

    grid = (dst_tiles, src_tiles); axis 1 is the reduction over source nodes.
      adj_ref : (TM, TK)        bf16 dense adjacency tile (dst, src)
      xs_ref  : (TK, Cin_pad)   f32 source-node features (K operand of A @ x)
      xd_ref  : (TM, Cin_pad)   f32 destination-node features (root weight term)
      w_ref   : (2*Cin_pad, Cout_pad) f32 stacked [W_l ; W_r]
      b_ref   : (1, Cout_pad)   f32 lin_l bias (zero in padded lanes)
      out_ref : (TM, Cout_pad)
      acc_ref : (TM, Cin_pad)   f32 VMEM accumulator for the neighbor sum
    """
    k = pl.program_id(1)

    @pl.when(k == 0)
    def _():
        acc_ref[...] = jnp.zeros_like(acc_ref)

    # Neighbor-sum aggregation: agg += A[i, k] @ x[k]   (bf16 x bf16, f32 acc)
    acc_ref[...] += jnp.dot(
        adj_ref[...],
        xs_ref[...].astype(jnp.bfloat16),
        preferred_element_type=jnp.float32,
    )

    @pl.when(k == pl.num_programs(1) - 1)
    def _():
        # Fused SAGEConv output: [agg | x_dst] @ [W_l ; W_r] + b   (once per tile)
        feats = jnp.concatenate([acc_ref[...], xd_ref[...]], axis=-1)
        h = jnp.dot(feats, w_ref[...], preferred_element_type=jnp.float32)
        h = h + b_ref[...]
        if apply_act:
            h = jnp.maximum(h, 0.0)                                   # relu
            # F.normalize(dim=-1): x / max(||x||, 1e-12)  (rsqrt -> EUP slot)
            sumsq = jnp.sum(h * h, axis=-1, keepdims=True)
            h = h * lax.rsqrt(jnp.maximum(sumsq, 1e-24))
            # TODO(synk): nn.Dropout(0.5) is identity in eval mode; no RNG mask.
        out_ref[...] = h.astype(out_ref.dtype)


def sage_layer(adj, x, w_stacked, b, *, apply_act, tm, tk):
    """One fused, tiled SAGEConv (+ optional relu/normalize) layer."""
    n_pad, cin_pad = x.shape
    cout_pad = w_stacked.shape[1]
    grid = (n_pad // tm, n_pad // tk)
    kernel = functools.partial(_sage_layer_kernel, apply_act=apply_act)
    return pl.pallas_call(
        kernel,
        out_shape=jax.ShapeDtypeStruct((n_pad, cout_pad), jnp.float32),
        grid_spec=pltpu.PrefetchScalarGridSpec(
            num_scalar_prefetch=0,
            grid=grid,
            in_specs=[
                pl.BlockSpec((tm, tk), lambda i, k: (i, k)),             # adj (dst, src)
                pl.BlockSpec((tk, cin_pad), lambda i, k: (k, 0)),        # x source rows
                pl.BlockSpec((tm, cin_pad), lambda i, k: (i, 0)),        # x dest rows
                pl.BlockSpec((2 * cin_pad, cout_pad), lambda i, k: (0, 0)),  # [W_l; W_r]
                pl.BlockSpec((1, cout_pad), lambda i, k: (0, 0)),        # bias
            ],
            out_specs=pl.BlockSpec((tm, cout_pad), lambda i, k: (i, 0)),
            scratch_shapes=[pltpu.VMEM((tm, cin_pad), jnp.float32)],
        ),
        compiler_params=pltpu.CompilerParams(
            dimension_semantics=("parallel", "arbitrary"),
            vmem_limit_bytes=32 * 1024 * 1024,
        ),
    )(adj, x, x, w_stacked, b)


def sage_encoder(x, edge_index, params, *, tile=512):
    """Forward pass of SageEncoder. params = list of (w_l, b_l, w_r) per layer."""
    n, cin = x.shape
    n_layers = len(params)

    # Node tiling: square tiles (512 at realistic N), nodes padded to the tile;
    # channels padded to multiples of 128 (lane-dense operands and outputs).
    tm = tile if n >= tile else _round_up(n, 128)
    n_pad = _round_up(n, tm)

    # Dense adjacency built ONCE and reused by every layer: A[dst, src] += 1.
    # bf16 is exact for small integer edge counts and halves adj HBM bytes.
    src, dst = edge_index[0], edge_index[1]
    adj = (jnp.zeros((n_pad, n_pad), jnp.float32)
           .at[dst, src].add(1.0)
           .astype(jnp.bfloat16))
    # TODO(synk): for realistically sparse graphs replace the dense O(N^2) adjacency
    # with a PrefetchScalarGridSpec CSR gather / blocked segment-sum aggregation.
    # TODO(synk): on v5e/v6e an int8 adjacency would quarter adj bytes (no int MXU on v7x).

    cin_pad0 = _round_up(cin, 128)
    h = jnp.zeros((n_pad, cin_pad0), jnp.float32).at[:n, :cin].set(x)

    for li, (w_l, b_l, w_r) in enumerate(params):
        cin_l, cout_l = w_l.shape
        cin_p = _round_up(cin_l, 128)
        cout_p = _round_up(cout_l, 128)
        assert h.shape[1] == cin_p, "channel padding mismatch between layers"
        # Zero-pad and stack the two weights into a single fused (2*Cin, Cout) operand.
        w_stacked = jnp.zeros((2 * cin_p, cout_p), jnp.float32)
        w_stacked = w_stacked.at[:cin_l, :cout_l].set(w_l)
        w_stacked = w_stacked.at[cin_p:cin_p + cin_l, :cout_l].set(w_r)
        b_pad = jnp.zeros((1, cout_p), jnp.float32).at[:, :cout_l].set(b_l)
        h = sage_layer(adj, h, w_stacked, b_pad,
                       apply_act=(li < n_layers - 1), tm=tm, tk=tm)

    cout_last = params[-1][0].shape[1]
    return h[:n, :cout_last]


def sage_encoder_ref(x, edge_index, params):
    """Pure-JAX reference (f32) matching the PyTorch module semantics."""
    n = x.shape[0]
    src, dst = edge_index[0], edge_index[1]
    adj = jnp.zeros((n, n), jnp.float32).at[dst, src].add(1.0)
    n_layers = len(params)
    for li, (w_l, b_l, w_r) in enumerate(params):
        agg = adj @ x
        h = agg @ w_l + b_l + x @ w_r
        if li < n_layers - 1:
            h = jnp.maximum(h, 0.0)
            nrm = jnp.sqrt(jnp.sum(h * h, axis=-1, keepdims=True))
            h = h / jnp.maximum(nrm, 1e-12)
        x = h
    return x


def init_params(key, in_channels, out_channels, n_layers=2):
    params = []
    dims = [(in_channels, out_channels)] + [(out_channels, out_channels)] * (n_layers - 1)
    for (cin, cout) in dims:
        key, k1, k2, k3 = jax.random.split(key, 4)
        scale = 1.0 / jnp.sqrt(jnp.float32(cin))
        w_l = jax.random.uniform(k1, (cin, cout), jnp.float32, -scale, scale)
        b_l = jax.random.uniform(k2, (1, cout), jnp.float32, -scale, scale)
        w_r = jax.random.uniform(k3, (cin, cout), jnp.float32, -scale, scale)
        params.append((w_l, b_l, w_r))
    return params


if __name__ == "__main__":
    key = jax.random.PRNGKey(0)
    N, IN_CH, OUT_CH, N_LAYERS = 16, 16, 32, 2

    k_x, k_e, k_p = jax.random.split(key, 3)
    x = jax.random.normal(k_x, (N, IN_CH), jnp.float32)

    # deterministic edge_index (2, E): a ring plus a few extra directed edges
    ring_src = jnp.arange(N, dtype=jnp.int32)
    ring_dst = (ring_src + 1) % N
    extra_src = jax.random.randint(k_e, (8,), 0, N, jnp.int32)
    extra_dst = (extra_src + 5) % N
    edge_index = jnp.stack(
        [jnp.concatenate([ring_src, extra_src]),
         jnp.concatenate([ring_dst, extra_dst])],
        axis=0,
    )

    params = init_params(k_p, IN_CH, OUT_CH, N_LAYERS)

    out = sage_encoder(x, edge_index, params)
    jax.block_until_ready(out)
    assert out.shape == (N, OUT_CH)

    ref = sage_encoder_ref(x, edge_index, params)
    np.testing.assert_allclose(np.asarray(out), np.asarray(ref), rtol=5e-2, atol=5e-2)

    print("KERNEL_OK")
</pallas_src>

<mosaic_0001>
module attributes {stable_mosaic.version = 11 : i64} {
  func.func @_sage_layer_kernel(%arg0: i32, %arg1: i32, %arg2: memref<128x128xbf16, #tpu.memory_space<vmem>>, %arg3: memref<128x128xf32, #tpu.memory_space<vmem>>, %arg4: memref<128x128xf32, #tpu.memory_space<vmem>>, %arg5: memref<256x128xf32, #tpu.memory_space<vmem>>, %arg6: memref<1x128xf32, #tpu.memory_space<vmem>>, %arg7: memref<128x128xf32, #tpu.memory_space<vmem>>, %arg8: memref<128x128xf32, #tpu.memory_space<vmem>>) attributes {dimension_semantics = [#tpu.dimension_semantics<parallel>, #tpu.dimension_semantics<arbitrary>], iteration_bounds = array<i64: 1, 1>, scalar_prefetch = 0 : i64, scratch_operands = 1 : i64, tpu.core_type = #tpu.core_type<tc>, window_params = [{transform_indices = @transform_0, window_bounds = array<i64: 128, 128>}, {transform_indices = @transform_1, window_bounds = array<i64: 128, 128>}, {transform_indices = @transform_2, window_bounds = array<i64: 128, 128>}, {pipeline_mode = #tpu.pipeline_mode<synchronous>, transform_indices = @transform_3, window_bounds = array<i64: 256, 128>}, {pipeline_mode = #tpu.pipeline_mode<synchronous>, transform_indices = @transform_4, window_bounds = array<i64: 1, 128>}, {transform_indices = @transform_5, window_bounds = array<i64: 128, 128>}]} {
    %c0_i32 = arith.constant 0 : i32
    %0 = arith.cmpi eq, %arg1, %c0_i32 : i32
    %1 = arith.extui %0 : i1 to i32
    %c0_i32_0 = arith.constant 0 : i32
    %2 = arith.cmpi ne, %1, %c0_i32_0 : i32
    scf.if %2 {
      %cst_10 = arith.constant 0.000000e+00 : f32
      %13 = vector.broadcast %cst_10 : f32 to vector<128x128xf32>
      %c0_11 = arith.constant 0 : index
      %c0_12 = arith.constant 0 : index
      %14 = vector.load %arg8[%c0_11, %c0_12] : memref<128x128xf32, #tpu.memory_space<vmem>>, vector<128x128xf32>
      tpu.vector_store %arg8[%c0_11, %c0_12], %13 {strides = array<i32>} : memref<128x128xf32, #tpu.memory_space<vmem>>, vector<128x128xf32>,
    } else {
    }
    %c0 = arith.constant 0 : index
    %c0_1 = arith.constant 0 : index
    %3 = vector.load %arg8[%c0, %c0_1] : memref<128x128xf32, #tpu.memory_space<vmem>>, vector<128x128xf32>
    %c0_2 = arith.constant 0 : index
    %c0_3 = arith.constant 0 : index
    %4 = vector.load %arg2[%c0_2, %c0_3] : memref<128x128xbf16, #tpu.memory_space<vmem>>, vector<128x128xbf16>
    %c0_4 = arith.constant 0 : index
    %c0_5 = arith.constant 0 : index
    %5 = vector.load %arg3[%c0_4, %c0_5] : memref<128x128xf32, #tpu.memory_space<vmem>>, vector<128x128xf32>
    %6 = arith.truncf %5 : vector<128x128xf32> to vector<128x128xbf16>
    %cst = arith.constant dense<0.000000e+00> : vector<128x128xf32>
    %7 = tpu.matmul %4, %6, %cst {dimension_numbers = #tpu.dot_dimension_numbers<[1], [0], [0], [1], [0, 0, 1, 1], [], []>} : vector<128x128xbf16>, vector<128x128xbf16>, vector<128x128xf32> -> vector<128x128xf32>
    %8 = arith.addf %3, %7 : vector<128x128xf32>
    %c0_6 = arith.constant 0 : index
    %c0_7 = arith.constant 0 : index
    %9 = vector.load %arg8[%c0_6, %c0_7] : memref<128x128xf32, #tpu.memory_space<vmem>>, vector<128x128xf32>
    tpu.vector_store %arg8[%c0_6, %c0_7], %8 {strides = array<i32>} : memref<128x128xf32, #tpu.memory_space<vmem>>, vector<128x128xf32>,
    %c0_i32_8 = arith.constant 0 : i32
    %10 = arith.cmpi eq, %arg1, %c0_i32_8 : i32
    %11 = arith.extui %10 : i1 to i32
    %c0_i32_9 = arith.constant 0 : i32
    %12 = arith.cmpi ne, %11, %c0_i32_9 : i32
    scf.if %12 {
      %c0_10 = arith.constant 0 : index
      %c0_11 = arith.constant 0 : index
      %13 = vector.load %arg8[%c0_10, %c0_11] : memref<128x128xf32, #tpu.memory_space<vmem>>, vector<128x128xf32>
      %c0_12 = arith.constant 0 : index
      %c0_13 = arith.constant 0 : index
      %14 = vector.load %arg4[%c0_12, %c0_13] : memref<128x128xf32, #tpu.memory_space<vmem>>, vector<128x128xf32>
      %15 = tpu.concatenate %13, %14 in 1 : vector<128x128xf32>, vector<128x128xf32> -> vector<128x256xf32>
      %c0_14 = arith.constant 0 : index
      %c0_15 = arith.constant 0 : index
      %16 = vector.load %arg5[%c0_14, %c0_15] : memref<256x128xf32, #tpu.memory_space<vmem>>, vector<256x128xf32>
      %cst_16 = arith.constant dense<0.000000e+00> : vector<128x128xf32>
      %17 = tpu.matmul %15, %16, %cst_16 {dimension_numbers = #tpu.dot_dimension_numbers<[1], [0], [0], [1], [0, 0, 1, 1], [], []>} : vector<128x256xf32>, vector<256x128xf32>, vector<128x128xf32> -> vector<128x128xf32>
      %c0_17 = arith.constant 0 : index
      %c0_18 = arith.constant 0 : index
      %18 = vector.load %arg6[%c0_17, %c0_18] : memref<1x128xf32, #tpu.memory_space<vmem>>, vector<1x128xf32>
      %19 = vector.broadcast %18 : vector<1x128xf32> to vector<128x128xf32>
      %20 = arith.addf %17, %19 : vector<128x128xf32>
      %cst_19 = arith.constant 0.000000e+00 : f32
      %21 = vector.broadcast %cst_19 : f32 to vector<128x128xf32>
      %22 = arith.maximumf %20, %21 : vector<128x128xf32>
      %23 = arith.mulf %22, %22 : vector<128x128xf32>
      %cst_20 = arith.constant dense<0.000000e+00> : vector<128xf32>
      %24 = vector.multi_reduction <add>, %23, %cst_20 [1] : vector<128x128xf32> to vector<128xf32>
      %25 = vector.shape_cast %24 : vector<128xf32> to vector<128x1xf32>
      %cst_21 = arith.constant 1.000000e-24 : f32
      %26 = vector.broadcast %cst_21 : f32 to vector<128x1xf32>
      %27 = arith.maximumf %25, %26 : vector<128x1xf32>
      %28 = math.rsqrt %27 : vector<128x1xf32>
      %29 = vector.broadcast %28 : vector<128x1xf32> to vector<128x128xf32>
      %30 = arith.mulf %22, %29 : vector<128x128xf32>
      %c0_22 = arith.constant 0 : index
      %c0_23 = arith.constant 0 : index
      %31 = vector.load %arg7[%c0_22, %c0_23] : memref<128x128xf32, #tpu.memory_space<vmem>>, vector<128x128xf32>
      tpu.vector_store %arg7[%c0_22, %c0_23], %30 {strides = array<i32>} : memref<128x128xf32, #tpu.memory_space<vmem>>, vector<128x128xf32>,
    } else {
    }
    return
  }
  func.func @transform_0(%arg0: i32, %arg1: i32) -> (i32, i32) {
    %c0_i32 = arith.constant 0 : i32
    return %arg0, %arg1 : i32, i32
  }
  func.func @transform_1(%arg0: i32, %arg1: i32) -> (i32, i32) {
    %c0_i32 = arith.constant 0 : i32
    %c0_i32_0 = arith.constant 0 : i32
    return %arg1, %c0_i32 : i32, i32
  }
  func.func @transform_2(%arg0: i32, %arg1: i32) -> (i32, i32) {
    %c0_i32 = arith.constant 0 : i32
    %c0_i32_0 = arith.constant 0 : i32
    return %arg0, %c0_i32 : i32, i32
  }
  func.func @transform_3(%arg0: i32, %arg1: i32) -> (i32, i32) {
    %c0_i32 = arith.constant 0 : i32
    %c0_i32_0 = arith.constant 0 : i32
    %c0_i32_1 = arith.constant 0 : i32
    return %c0_i32, %c0_i32_0 : i32, i32
  }
  func.func @transform_4(%arg0: i32, %arg1: i32) -> (i32, i32) {
    %c0_i32 = arith.constant 0 : i32
    %c0_i32_0 = arith.constant 0 : i32
    %c0_i32_1 = arith.constant 0 : i32
    return %c0_i32, %c0_i32_0 : i32, i32
  }
  func.func @transform_5(%arg0: i32, %arg1: i32) -> (i32, i32) {
    %c0_i32 = arith.constant 0 : i32
    %c0_i32_0 = arith.constant 0 : i32
    return %arg0, %c0_i32 : i32, i32
  }
}

</mosaic_0001>

<llo_original>
// kernel: tpu_custom_call.1
$region0: #{tpu_custom_call.1}
  #allocation0 [shape = 'u32[]', space=smem, size = 0x4, offset = 0x4, fixed_abs, tag = 'smem constant byte address 0x4 - core index']
  #allocation1 [shape = 'u32[72,128]{1,0:T(1,128)}', space=vmem, size = 0x9000, scoped, tag = 'internal scratch']
  #allocation2 [shape = 'f32[128,128]{1,0:T(8,128)}', space=vmem, size = 0x10000, scoped, tag = 'scratch operand']
  %s0 = inlined_call_operand.hbm [shape: bf16[128,128], index: 0, kind: input, shape index: {}]
  %s1 = inlined_call_operand.hbm [shape: f32[128,128], index: 1, kind: input, shape index: {}]
  %s2 = inlined_call_operand.hbm [shape: f32[128,128], index: 2, kind: input, shape index: {}]
  %s3 = inlined_call_operand.hbm [shape: f32[256,128], index: 3, kind: input, shape index: {}]
  %s4 = inlined_call_operand.vmem [shape: f32[1,128], index: 4, kind: input, shape index: {}]
  %s5 = inlined_call_operand.hbm [shape: f32[128,128], index: 5, kind: output, shape index: {}]
  %s6 = sld [smem:[#allocation0]]
  $region54: #{tpu_custom_call.1} parent=0
    _
  %s8 = ssub.s32 1, %s6
  %s9 = scalar_select 0, %s8, %s6
  $region1: #{tpu_custom_call.1} parent=0
    #allocation3 [shape = 'u8[32768]{0}', space=vmem, size = 0x8000, scoped, tag = 'input window, operand 0, single buffered']
    #allocation4 [shape = 's32[1]{0}', space=sflag, size = 0x4, scoped, tag = 'scoped memory for tpu_custom_call.1']
    #allocation5 [shape = 's32[1]{0}', space=sflag, size = 0x4, scoped, tag = 'scoped memory for tpu_custom_call.1']
    #allocation6 [shape = 'u8[65536]{0}', space=vmem, size = 0x10000, scoped, tag = 'input window, operand 1, single buffered']
    #allocation7 [shape = 's32[1]{0}', space=sflag, size = 0x4, scoped, tag = 'scoped memory for tpu_custom_call.1']
    #allocation8 [shape = 'u8[65536]{0}', space=vmem, size = 0x10000, scoped, tag = 'input window, operand 2, single buffered']
    #allocation9 [shape = 'u8[131072]{0}', space=vmem, size = 0x20000, scoped, tag = 'input window, operand 3, single buffered']
    #allocation10 [shape = 's32[1]{0}', space=sflag, size = 0x4, scoped, tag = 'scoped memory for tpu_custom_call.1']
    #allocation11 [shape = 'u8[65536]{0}', space=vmem, size = 0x10000, scoped, tag = 'output window, operand 0, single buffered']
    %10 = vsyncpa [#allocation4], 0
    %11 = vsyncpa [#allocation7], 0
    %12 = vsyncpa [#allocation10], 0
    %13 = vsyncpa [#allocation5], 0
    // Predicated region
    $region2: #{tpu_custom_call.1} parent=1 // pred_check
      _
    $region3: #{tpu_custom_call.1} parent=1 // pred_check_branch
      %15 = sbr.rel (0) target = $region5
    $region4: #{tpu_custom_call.1} parent=1 // pred_region
      %17 = vsyncadd [#allocation4], 0
      %s18 = sshll.u32 %s0, 4
      %s19 = int_to_ptr.hbm [resolvable:$true] %s18
      %s20 = sshll.u32 [#allocation3], 4
      %s21 = int_to_ptr.vmem [resolvable:$true] %s20
      %26 = dma.hbm_to_vmem [thread:$0]  %s19, 1024, %s21, [#allocation4], 64, 64, 4
    $region5: #{tpu_custom_call.1} parent=1 // pred_fallthru
      _
    // Predicated region
    $region6: #{tpu_custom_call.1} parent=1 // pred_check
      _
    $region7: #{tpu_custom_call.1} parent=1 // pred_check_branch
      %28 = sbr.rel (0) target = $region9
    $region8: #{tpu_custom_call.1} parent=1 // pred_region
      %30 = vsyncadd [#allocation7], 0
      %s31 = sshll.u32 %s1, 4
      %s32 = int_to_ptr.hbm [resolvable:$true] %s31
      %s33 = sshll.u32 [#allocation6], 4
      %s34 = int_to_ptr.vmem [resolvable:$true] %s33
      %39 = dma.hbm_to_vmem [thread:$0]  %s32, 2048, %s34, [#allocation7], 128, 128, 8
    $region9: #{tpu_custom_call.1} parent=1 // pred_fallthru
      _
    // Predicated region
    $region10: #{tpu_custom_call.1} parent=1 // pred_check
      _
    $region11: #{tpu_custom_call.1} parent=1 // pred_check_branch
      %41 = sbr.rel (0) target = $region13
    $region12: #{tpu_custom_call.1} parent=1 // pred_region
      %43 = vsyncadd [#allocation7], 0
      %s44 = sshll.u32 %s2, 4
      %s45 = int_to_ptr.hbm [resolvable:$true] %s44
      %s46 = sshll.u32 [#allocation8], 4
      %s47 = int_to_ptr.vmem [resolvable:$true] %s46
      %52 = dma.hbm_to_vmem [thread:$0]  %s45, 2048, %s47, [#allocation7], 128, 128, 8
    $region13: #{tpu_custom_call.1} parent=1 // pred_fallthru
      _
    // Predicated region
    $region14: #{tpu_custom_call.1} parent=1 // pred_check
      _
    $region15: #{tpu_custom_call.1} parent=1 // pred_check_branch
      %54 = sbr.rel (0) target = $region17
    $region16: #{tpu_custom_call.1} parent=1 // pred_region
      %56 = vsyncadd [#allocation10], 0
      %s57 = sshll.u32 %s3, 4
      %s58 = int_to_ptr.hbm [resolvable:$true] %s57
      %s59 = sshll.u32 [#allocation9], 4
      %s60 = int_to_ptr.vmem [resolvable:$true] %s59
      %65 = dma.hbm_to_vmem [thread:$0]  %s58, 4096, %s60, [#allocation10], 128, 128, 8
    $region17: #{tpu_custom_call.1} parent=1 // pred_fallthru
      _
    // Predicated region
    $region18: #{tpu_custom_call.1} parent=1 // pred_check
      _
    $region19: #{tpu_custom_call.1} parent=1 // pred_check_branch
      %67 = sbr.rel (0) target = $region21
    $region20: #{tpu_custom_call.1} parent=1 // pred_region
      _
    $region21: #{tpu_custom_call.1} parent=1 // pred_fallthru
      _
    // Predicated region
    $region22: #{tpu_custom_call.1} parent=1 // pred_check
      _
    $region23: #{tpu_custom_call.1} parent=1 // pred_check_branch
      %69 = sbr.rel (0) target = $region25
    $region24: #{tpu_custom_call.1} parent=1 // pred_region
      %71 = dma.done [#allocation4], 1024
    $region25: #{tpu_custom_call.1} parent=1 // pred_fallthru
      _
    // Predicated region
    $region26: #{tpu_custom_call.1} parent=1 // pred_check
      _
    $region27: #{tpu_custom_call.1} parent=1 // pred_check_branch
      %73 = sbr.rel (0) target = $region29
    $region28: #{tpu_custom_call.1} parent=1 // pred_region
      %75 = dma.done [#allocation7], 2048
    $region29: #{tpu_custom_call.1} parent=1 // pred_fallthru
      _
    // Predicated region
    $region30: #{tpu_custom_call.1} parent=1 // pred_check
      _
    $region31: #{tpu_custom_call.1} parent=1 // pred_check_branch
      %77 = sbr.rel (0) target = $region33
    $region32: #{tpu_custom_call.1} parent=1 // pred_region
      %79 = dma.done [#allocation7], 2048
    $region33: #{tpu_custom_call.1} parent=1 // pred_fallthru
      _
    // Predicated region
    $region34: #{tpu_custom_call.1} parent=1 // pred_check
      _
    $region35: #{tpu_custom_call.1} parent=1 // pred_check_branch
      %81 = sbr.rel (0) target = $region37
    $region36: #{tpu_custom_call.1} parent=1 // pred_region
      %83 = dma.done [#allocation10], 4096
    $region37: #{tpu_custom_call.1} parent=1 // pred_fallthru
      _
    %p84 = scmp.eq.s32.totalorder 0, 0
    // Predicated region
    $region38: #{tpu_custom_call.1} parent=1 // pred_check
      %p85 = pneg %p84
    $region39: #{tpu_custom_call.1} parent=1 // pred_check_branch
      %87 = sbr.rel (%p85) target = $region41
    $region40: #{tpu_custom_call.1} parent=1 // pred_region
      %88 = vst [vmem:[#allocation2] sm:$0xff] 0.0
      %89 = vst [vmem:[#allocation2 + $0x8] sm:$0xff] 0.0
      %90 = vst [vmem:[#allocation2 + $0x10] sm:$0xff] 0.0
      %91 = vst [vmem:[#allocation2 + $0x18] sm:$0xff] 0.0
      %92 = vst [vmem:[#allocation2 + $0x20] sm:$0xff] 0.0
      %93 = vst [vmem:[#allocation2 + $0x28] sm:$0xff] 0.0
      %94 = vst [vmem:[#allocation2 + $0x30] sm:$0xff] 0.0
      %95 = vst [vmem:[#allocation2 + $0x38] sm:$0xff] 0.0
      %96 = vst [vmem:[#allocation2 + $0x40] sm:$0xff] 0.0
      %97 = vst [vmem:[#allocation2 + $0x48] sm:$0xff] 0.0
      %98 = vst [vmem:[#allocation2 + $0x50] sm:$0xff] 0.0
      %99 = vst [vmem:[#allocation2 + $0x58] sm:$0xff] 0.0
      %100 = vst [vmem:[#allocation2 + $0x60] sm:$0xff] 0.0
      %101 = vst [vmem:[#allocation2 + $0x68] sm:$0xff] 0.0
      %102 = vst [vmem:[#allocation2 + $0x70] sm:$0xff] 0.0
      %103 = vst [vmem:[#allocation2 + $0x78] sm:$0xff] 0.0
    $region41: #{tpu_custom_call.1} parent=1 // pred_fallthru
      _
    %v104 = vld [vmem:[#allocation2] sm:$0xff]
    %v105 = vld [vmem:[#allocation2 + $0x8] sm:$0xff]
    %v106 = vld [vmem:[#allocation2 + $0x10] sm:$0xff]
    %v107 = vld [vmem:[#allocation2 + $0x18] sm:$0xff]
    %v108 = vld [vmem:[#allocation2 + $0x20] sm:$0xff]
    %v109 = vld [vmem:[#allocation2 + $0x28] sm:$0xff]
    %v110 = vld [vmem:[#allocation2 + $0x30] sm:$0xff]
    %v111 = vld [vmem:[#allocation2 + $0x38] sm:$0xff]
    %v112 = vld [vmem:[#allocation2 + $0x40] sm:$0xff]
    %v113 = vld [vmem:[#allocation2 + $0x48] sm:$0xff]
    %v114 = vld [vmem:[#allocation2 + $0x50] sm:$0xff]
    %v115 = vld [vmem:[#allocation2 + $0x58] sm:$0xff]
    %v116 = vld [vmem:[#allocation2 + $0x60] sm:$0xff]
    %v117 = vld [vmem:[#allocation2 + $0x68] sm:$0xff]
    %v118 = vld [vmem:[#allocation2 + $0x70] sm:$0xff]
    %v119 = vld [vmem:[#allocation2 + $0x78] sm:$0xff]
    %v120 = vld [vmem:[#allocation3] sm:$0xf]
    %v121 = vld [vmem:[#allocation3 + $0x4] sm:$0xf]
    %v122 = vld [vmem:[#allocation3 + $0x8] sm:$0xf]
    %v123 = vld [vmem:[#allocation3 + $0xc] sm:$0xf]
    %v124 = vld [vmem:[#allocation3 + $0x10] sm:$0xf]
    %v125 = vld [vmem:[#allocation3 + $0x14] sm:$0xf]
    %v126 = vld [vmem:[#allocation3 + $0x18] sm:$0xf]
    %v127 = vld [vmem:[#allocation3 + $0x1c] sm:$0xf]
    %v128 = vld [vmem:[#allocation3 + $0x20] sm:$0xf]
    %v129 = vld [vmem:[#allocation3 + $0x24] sm:$0xf]
    %v130 = vld [vmem:[#allocation3 + $0x28] sm:$0xf]
    %v131 = vld [vmem:[#allocation3 + $0x2c] sm:$0xf]
    %v132 = vld [vmem:[#allocation3 + $0x30] sm:$0xf]
    %v133 = vld [vmem:[#allocation3 + $0x34] sm:$0xf]
    %v134 = vld [vmem:[#allocation3 + $0x38] sm:$0xf]
    %v135 = vld [vmem:[#allocation3 + $0x3c] sm:$0xf]
    %v136 = vld [vmem:[#allocation6] sm:$0xff]
    %v137 = vld [vmem:[#allocation6 + $0x8] sm:$0xff]
    %v138 = vld [vmem:[#allocation6 + $0x10] sm:$0xff]
    %v139 = vld [vmem:[#allocation6 + $0x18] sm:$0xff]
    %v140 = vld [vmem:[#allocation6 + $0x20] sm:$0xff]
    %v141 = vld [vmem:[#allocation6 + $0x28] sm:$0xff]
    %v142 = vld [vmem:[#allocation6 + $0x30] sm:$0xff]
    %v143 = vld [vmem:[#allocation6 + $0x38] sm:$0xff]
    %v144 = vld [vmem:[#allocation6 + $0x40] sm:$0xff]
    %v145 = vld [vmem:[#allocation6 + $0x48] sm:$0xff]
    %v146 = vld [vmem:[#allocation6 + $0x50] sm:$0xff]
    %v147 = vld [vmem:[#allocation6 + $0x58] sm:$0xff]
    %v148 = vld [vmem:[#allocation6 + $0x60] sm:$0xff]
    %v149 = vld [vmem:[#allocation6 + $0x68] sm:$0xff]
    %v150 = vld [vmem:[#allocation6 + $0x70] sm:$0xff]
    %v151 = vld [vmem:[#allocation6 + $0x78] sm:$0xff]
    %v152 = vpack.c.bf16 %v137, %v136
    %v153 = vpack.c.bf16 %v139, %v138
    %v154 = vpack.c.bf16 %v141, %v140
    %v155 = vpack.c.bf16 %v143, %v142
    %v156 = vpack.c.bf16 %v145, %v144
    %v157 = vpack.c.bf16 %v147, %v146
    %v158 = vpack.c.bf16 %v149, %v148
    %v159 = vpack.c.bf16 %v151, %v150
    %v176 = vunpack.c.l.b16 %v120
    %v177 = vunpack.c.l.b16 %v121
    %v178 = vunpack.c.l.b16 %v122
    %v179 = vunpack.c.l.b16 %v123
    %v180 = vunpack.c.l.b16 %v124
    %v181 = vunpack.c.l.b16 %v125
    %v182 = vunpack.c.l.b16 %v126
    %v183 = vunpack.c.l.b16 %v127
    %v184 = vunpack.c.l.b16 %v128
    %v185 = vunpack.c.l.b16 %v129
    %v186 = vunpack.c.l.b16 %v130
    %v187 = vunpack.c.l.b16 %v131
    %v188 = vunpack.c.l.b16 %v132
    %v189 = vunpack.c.l.b16 %v133
    %v190 = vunpack.c.l.b16 %v134
    %v191 = vunpack.c.l.b16 %v135
    %v192 = vpack.c.b16 %v177, %v176
    %v193 = vpack.c.b16 %v179, %v178
    %v194 = vpack.c.b16 %v181, %v180
    %v195 = vpack.c.b16 %v183, %v182
    %v196 = vpack.c.b16 %v185, %v184
    %v197 = vpack.c.b16 %v187, %v186
    %v198 = vpack.c.b16 %v189, %v188
    %v199 = vpack.c.b16 %v191, %v190
    %208 = vmatpush.bf16.msra.mxu0 %v159
    %209 = vmatpush.bf16.msra.mxu0 %v158
    %210 = vmatpush.bf16.msra.mxu0 %v157
    %211 = vmatpush.bf16.msra.mxu0 %v156
    %212 = vmatpush.bf16.msra.mxu0 %v155
    %213 = vmatpush.bf16.msra.mxu0 %v154
    %214 = vmatpush.bf16.msra.mxu0 %v153
    %215 = vmatpush.bf16.msra.mxu0 %v152
    %216 = vmatmul.bf16.gmra.mxu0 %v192
    %v217 = vpop.f32.mrf.mxu0
    %v218 = vadd.f32 0.0, %v217
    %v219 = vpop.f32.mrf.mxu0
    %v220 = vadd.f32 0.0, %v219
    %221 = vmatmul.bf16.gmra.mxu0 %v193
    %v222 = vpop.f32.mrf.mxu0
    %v223 = vadd.f32 0.0, %v222
    %v224 = vpop.f32.mrf.mxu0
    %v225 = vadd.f32 0.0, %v224
    %226 = vmatmul.bf16.gmra.mxu0 %v194
    %v227 = vpop.f32.mrf.mxu0
    %v228 = vadd.f32 0.0, %v227
    %v229 = vpop.f32.mrf.mxu0
    %v230 = vadd.f32 0.0, %v229
    %231 = vmatmul.bf16.gmra.mxu0 %v195
    %v232 = vpop.f32.mrf.mxu0
    %v233 = vadd.f32 0.0, %v232
    %v234 = vpop.f32.mrf.mxu0
    %v235 = vadd.f32 0.0, %v234
    %236 = vmatmul.bf16.gmra.mxu0 %v196
    %v237 = vpop.f32.mrf.mxu0
    %v238 = vadd.f32 0.0, %v237
    %v239 = vpop.f32.mrf.mxu0
    %v240 = vadd.f32 0.0, %v239
    %241 = vmatmul.bf16.gmra.mxu0 %v197
    %v242 = vpop.f32.mrf.mxu0
    %v243 = vadd.f32 0.0, %v242
    %v244 = vpop.f32.mrf.mxu0
    %v245 = vadd.f32 0.0, %v244
    %246 = vmatmul.bf16.gmra.mxu0 %v198
    %v247 = vpop.f32.mrf.mxu0
    %v248 = vadd.f32 0.0, %v247
    %v249 = vpop.f32.mrf.mxu0
    %v250 = vadd.f32 0.0, %v249
    %251 = vmatmul.bf16.gmra.mxu0 %v199
    %v252 = vpop.f32.mrf.mxu0
    %v253 = vadd.f32 0.0, %v252
    %v254 = vpop.f32.mrf.mxu0
    %v255 = vadd.f32 0.0, %v254
    %256 = vdwg.mxu0
    %v257 = vadd.f32 %v104, %v218
    %v258 = vadd.f32 %v105, %v220
    %v259 = vadd.f32 %v106, %v223
    %v260 = vadd.f32 %v107, %v225
    %v261 = vadd.f32 %v108, %v228
    %v262 = vadd.f32 %v109, %v230
    %v263 = vadd.f32 %v110, %v233
    %v264 = vadd.f32 %v111, %v235
    %v265 = vadd.f32 %v112, %v238
    %v266 = vadd.f32 %v113, %v240
    %v267 = vadd.f32 %v114, %v243
    %v268 = vadd.f32 %v115, %v245
    %v269 = vadd.f32 %v116, %v248
    %v270 = vadd.f32 %v117, %v250
    %v271 = vadd.f32 %v118, %v253
    %v272 = vadd.f32 %v119, %v255
    %273 = vst [vmem:[#allocation2] sm:$0xff] %v257
    %274 = vst [vmem:[#allocation2 + $0x8] sm:$0xff] %v258
    %275 = vst [vmem:[#allocation2 + $0x10] sm:$0xff] %v259
    %276 = vst [vmem:[#allocation2 + $0x18] sm:$0xff] %v260
    %277 = vst [vmem:[#allocation2 + $0x20] sm:$0xff] %v261
    %278 = vst [vmem:[#allocation2 + $0x28] sm:$0xff] %v262
    %279 = vst [vmem:[#allocation2 + $0x30] sm:$0xff] %v263
    %280 = vst [vmem:[#allocation2 + $0x38] sm:$0xff] %v264
    %281 = vst [vmem:[#allocation2 + $0x40] sm:$0xff] %v265
    %282 = vst [vmem:[#allocation2 + $0x48] sm:$0xff] %v266
    %283 = vst [vmem:[#allocation2 + $0x50] sm:$0xff] %v267
    %284 = vst [vmem:[#allocation2 + $0x58] sm:$0xff] %v268
    %285 = vst [vmem:[#allocation2 + $0x60] sm:$0xff] %v269
    %286 = vst [vmem:[#allocation2 + $0x68] sm:$0xff] %v270
    %287 = vst [vmem:[#allocation2 + $0x70] sm:$0xff] %v271
    %288 = vst [vmem:[#allocation2 + $0x78] sm:$0xff] %v272
    // Predicated region
    $region42: #{tpu_custom_call.1} parent=1 // pred_check
      %p289 = pneg %p84
    $region43: #{tpu_custom_call.1} parent=1 // pred_check_branch
      %291 = sbr.rel (%p289) target = $region45
    $region44: #{tpu_custom_call.1} parent=1 // pred_region
      %v292 = vld [vmem:[#allocation2] sm:$0xff]
      %v293 = vld [vmem:[#allocation2 + $0x8] sm:$0xff]
      %v294 = vld [vmem:[#allocation2 + $0x10] sm:$0xff]
      %v295 = vld [vmem:[#allocation2 + $0x18] sm:$0xff]
      %v296 = vld [vmem:[#allocation2 + $0x20] sm:$0xff]
      %v297 = vld [vmem:[#allocation2 + $0x28] sm:$0xff]
      %v298 = vld [vmem:[#allocation2 + $0x30] sm:$0xff]
      %v299 = vld [vmem:[#allocation2 + $0x38] sm:$0xff]
      %v300 = vld [vmem:[#allocation2 + $0x40] sm:$0xff]
      %v301 = vld [vmem:[#allocation2 + $0x48] sm:$0xff]
      %v302 = vld [vmem:[#allocation2 + $0x50] sm:$0xff]
      %v303 = vld [vmem:[#allocation2 + $0x58] sm:$0xff]
      %v304 = vld [vmem:[#allocation2 + $0x60] sm:$0xff]
      %v305 = vld [vmem:[#allocation2 + $0x68] sm:$0xff]
      %v306 = vld [vmem:[#allocation2 + $0x70] sm:$0xff]
      %v307 = vld [vmem:[#allocation2 + $0x78] sm:$0xff]
      %v308 = vld [vmem:[#allocation8] sm:$0xff]
      %v309 = vld [vmem:[#allocation8 + $0x8] sm:$0xff]
      %v310 = vld [vmem:[#allocation8 + $0x10] sm:$0xff]
      %v311 = vld [vmem:[#allocation8 + $0x18] sm:$0xff]
      %v312 = vld [vmem:[#allocation8 + $0x20] sm:$0xff]
      %v313 = vld [vmem:[#allocation8 + $0x28] sm:$0xff]
      %v314 = vld [vmem:[#allocation8 + $0x30] sm:$0xff]
      %v315 = vld [vmem:[#allocation8 + $0x38] sm:$0xff]
      %v316 = vld [vmem:[#allocation8 + $0x40] sm:$0xff]
      %v317 = vld [vmem:[#allocation8 + $0x48] sm:$0xff]
      %v318 = vld [vmem:[#allocation8 + $0x50] sm:$0xff]
      %v319 = vld [vmem:[#allocation8 + $0x58] sm:$0xff]
      %v320 = vld [vmem:[#allocation8 + $0x60] sm:$0xff]
      %v321 = vld [vmem:[#allocation8 + $0x68] sm:$0xff]
      %v322 = vld [vmem:[#allocation8 + $0x70] sm:$0xff]
      %v323 = vld [vmem:[#allocation8 + $0x78] sm:$0xff]
      %v324 = vld [vmem:[#allocation9] sm:$0xff]
      %v325 = vld [vmem:[#allocation9 + $0x8] sm:$0xff]
      %v326 = vld [vmem:[#allocation9 + $0x10] sm:$0xff]
      %v327 = vld [vmem:[#allocation9 + $0x18] sm:$0xff]
      %v328 = vld [vmem:[#allocation9 + $0x20] sm:$0xff]
      %v329 = vld [vmem:[#allocation9 + $0x28] sm:$0xff]
      %v330 = vld [vmem:[#allocation9 + $0x30] sm:$0xff]
      %v331 = vld [vmem:[#allocation9 + $0x38] sm:$0xff]
      %v332 = vld [vmem:[#allocation9 + $0x40] sm:$0xff]
      %v333 = vld [vmem:[#allocation9 + $0x48] sm:$0xff]
      %v334 = vld [vmem:[#allocation9 + $0x50] sm:$0xff]
      %v335 = vld [vmem:[#allocation9 + $0x58] sm:$0xff]
      %v336 = vld [vmem:[#allocation9 + $0x60] sm:$0xff]
      %v337 = vld [vmem:[#allocation9 + $0x68] sm:$0xff]
      %v338 = vld [vmem:[#allocation9 + $0x70] sm:$0xff]
      %v339 = vld [vmem:[#allocation9 + $0x78] sm:$0xff]
      %v340 = vld [vmem:[#allocation9 + $0x80] sm:$0xff]
      %v341 = vld [vmem:[#allocation9 + $0x88] sm:$0xff]
      %v342 = vld [vmem:[#allocation9 + $0x90] sm:$0xff]
      %v343 = vld [vmem:[#allocation9 + $0x98] sm:$0xff]
      %v344 = vld [vmem:[#allocation9 + $0xa0] sm:$0xff]
      %v345 = vld [vmem:[#allocation9 + $0xa8] sm:$0xff]
      %v346 = vld [vmem:[#allocation9 + $0xb0] sm:$0xff]
      %v347 = vld [vmem:[#allocation9 + $0xb8] sm:$0xff]
      %v348 = vld [vmem:[#allocation9 + $0xc0] sm:$0xff]
      %v349 = vld [vmem:[#allocation9 + $0xc8] sm:$0xff]
      %v350 = vld [vmem:[#allocation9 + $0xd0] sm:$0xff]
      %v351 = vld [vmem:[#allocation9 + $0xd8] sm:$0xff]
      %v352 = vld [vmem:[#allocation9 + $0xe0] sm:$0xff]
      %v353 = vld [vmem:[#allocation9 + $0xe8] sm:$0xff]
      %v354 = vld [vmem:[#allocation9 + $0xf0] sm:$0xff]
      %v355 = vld [vmem:[#allocation9 + $0xf8] sm:$0xff]
      %v356 = vld [vmem:[%s4] sm:$0x1]
      %v358 = vperm.slane %v356, 0
      %360 = vmatpush.msra.mxu0 %v339
      %361 = vmatpush.msra.mxu0 %v338
      %362 = vmatpush.msra.mxu0 %v337
      %363 = vmatpush.msra.mxu0 %v336
      %364 = vmatpush.msra.mxu0 %v335
      %365 = vmatpush.msra.mxu0 %v334
      %366 = vmatpush.msra.mxu0 %v333
      %367 = vmatpush.msra.mxu0 %v332
      %368 = vmatpush.msra.mxu0 %v331
      %369 = vmatpush.msra.mxu0 %v330
      %370 = vmatpush.msra.mxu0 %v329
      %371 = vmatpush.msra.mxu0 %v328
      %372 = vmatpush.msra.mxu0 %v327
      %373 = vmatpush.msra.mxu0 %v326
      %374 = vmatpush.msra.mxu0 %v325
      %375 = vmatpush.msra.mxu0 %v324
      %376 = vmatmul.f32.gmra.mxu0 %v292
      %v377 = vpop.f32.mrf.mxu0
      %v378 = vadd.f32 %v358, %v377
      %379 = vmatmul.f32.gmra.mxu0 %v293
      %v380 = vpop.f32.mrf.mxu0
      %v381 = vadd.f32 %v358, %v380
      %382 = vmatmul.f32.gmra.mxu0 %v294
      %v383 = vpop.f32.mrf.mxu0
      %v384 = vadd.f32 %v358, %v383
      %385 = vmatmul.f32.gmra.mxu0 %v295
      %v386 = vpop.f32.mrf.mxu0
      %v387 = vadd.f32 %v358, %v386
      %388 = vmatmul.f32.gmra.mxu0 %v296
      %v389 = vpop.f32.mrf.mxu0
      %v390 = vadd.f32 %v358, %v389
      %391 = vmatmul.f32.gmra.mxu0 %v297
      %v392 = vpop.f32.mrf.mxu0
      %v393 = vadd.f32 %v358, %v392
      %394 = vmatmul.f32.gmra.mxu0 %v298
      %v395 = vpop.f32.mrf.mxu0
      %v396 = vadd.f32 %v358, %v395
      %397 = vmatmul.f32.gmra.mxu0 %v299
      %v398 = vpop.f32.mrf.mxu0
      %v399 = vadd.f32 %v358, %v398
      %400 = vmatmul.f32.gmra.mxu0 %v300
      %v401 = vpop.f32.mrf.mxu0
      %v402 = vadd.f32 %v358, %v401
      %403 = vmatmul.f32.gmra.mxu0 %v301
      %v404 = vpop.f32.mrf.mxu0
      %v405 = vadd.f32 %v358, %v404
      %406 = vmatmul.f32.gmra.mxu0 %v302
      %v407 = vpop.f32.mrf.mxu0
      %v408 = vadd.f32 %v358, %v407
      %409 = vmatmul.f32.gmra.mxu0 %v303
      %v410 = vpop.f32.mrf.mxu0
      %v411 = vadd.f32 %v358, %v410
      %412 = vmatmul.f32.gmra.mxu0 %v304
      %v413 = vpop.f32.mrf.mxu0
      %v414 = vadd.f32 %v358, %v413
      %415 = vmatmul.f32.gmra.mxu0 %v305
      %v416 = vpop.f32.mrf.mxu0
      %v417 = vadd.f32 %v358, %v416
      %418 = vmatmul.f32.gmra.mxu0 %v306
      %v419 = vpop.f32.mrf.mxu0
      %v420 = vadd.f32 %v358, %v419
      %421 = vmatmul.f32.gmra.mxu0 %v307
      %v422 = vpop.f32.mrf.mxu0
      %v423 = vadd.f32 %v358, %v422
      %424 = vdwg.mxu0
      %425 = vmatpush.msra.mxu0 %v355
      %426 = vmatpush.msra.mxu0 %v354
      %427 = vmatpush.msra.mxu0 %v353
      %428 = vmatpush.msra.mxu0 %v352
      %429 = vmatpush.msra.mxu0 %v351
      %430 = vmatpush.msra.mxu0 %v350
      %431 = vmatpush.msra.mxu0 %v349
      %432 = vmatpush.msra.mxu0 %v348
      %433 = vmatpush.msra.mxu0 %v347
      %434 = vmatpush.msra.mxu0 %v346
      %435 = vmatpush.msra.mxu0 %v345
      %436 = vmatpush.msra.mxu0 %v344
      %437 = vmatpush.msra.mxu0 %v343
      %438 = vmatpush.msra.mxu0 %v342
      %439 = vmatpush.msra.mxu0 %v341
      %440 = vmatpush.msra.mxu0 %v340
      %441 = vmatmul.f32.gmra.mxu0 %v308
      %v442 = vpop.f32.mrf.mxu0
      %v443 = vadd.f32 %v378, %v442
      %444 = vmatmul.f32.gmra.mxu0 %v309
      %v445 = vpop.f32.mrf.mxu0
      %v446 = vadd.f32 %v381, %v445
      %447 = vmatmul.f32.gmra.mxu0 %v310
      %v448 = vpop.f32.mrf.mxu0
      %v449 = vadd.f32 %v384, %v448
      %450 = vmatmul.f32.gmra.mxu0 %v311
      %v451 = vpop.f32.mrf.mxu0
      %v452 = vadd.f32 %v387, %v451
      %453 = vmatmul.f32.gmra.mxu0 %v312
      %v454 = vpop.f32.mrf.mxu0
      %v455 = vadd.f32 %v390, %v454
      %456 = vmatmul.f32.gmra.mxu0 %v313
      %v457 = vpop.f32.mrf.mxu0
      %v458 = vadd.f32 %v393, %v457
      %459 = vmatmul.f32.gmra.mxu0 %v314
      %v460 = vpop.f32.mrf.mxu0
      %v461 = vadd.f32 %v396, %v460
      %462 = vmatmul.f32.gmra.mxu0 %v315
      %v463 = vpop.f32.mrf.mxu0
      %v464 = vadd.f32 %v399, %v463
      %465 = vmatmul.f32.gmra.mxu0 %v316
      %v466 = vpop.f32.mrf.mxu0
      %v467 = vadd.f32 %v402, %v466
      %468 = vmatmul.f32.gmra.mxu0 %v317
      %v469 = vpop.f32.mrf.mxu0
      %v470 = vadd.f32 %v405, %v469
      %471 = vmatmul.f32.gmra.mxu0 %v318
      %v472 = vpop.f32.mrf.mxu0
      %v473 = vadd.f32 %v408, %v472
      %474 = vmatmul.f32.gmra.mxu0 %v319
      %v475 = vpop.f32.mrf.mxu0
      %v476 = vadd.f32 %v411, %v475
      %477 = vmatmul.f32.gmra.mxu0 %v320
      %v478 = vpop.f32.mrf.mxu0
      %v479 = vadd.f32 %v414, %v478
      %480 = vmatmul.f32.gmra.mxu0 %v321
      %v481 = vpop.f32.mrf.mxu0
      %v482 = vadd.f32 %v417, %v481
      %483 = vmatmul.f32.gmra.mxu0 %v322
      %v484 = vpop.f32.mrf.mxu0
      %v485 = vadd.f32 %v420, %v484
      %486 = vmatmul.f32.gmra.mxu0 %v323
      %v487 = vpop.f32.mrf.mxu0
      %v488 = vadd.f32 %v423, %v487
      %489 = vdwg.mxu0
      %v490 = vmax.f32 %v443, 0.0
      %v491 = vmax.f32 %v446, 0.0
      %v492 = vmax.f32 %v449, 0.0
      %v493 = vmax.f32 %v452, 0.0
      %v494 = vmax.f32 %v455, 0.0
      %v495 = vmax.f32 %v458, 0.0
      %v496 = vmax.f32 %v461, 0.0
      %v497 = vmax.f32 %v464, 0.0
      %v498 = vmax.f32 %v467, 0.0
      %v499 = vmax.f32 %v470, 0.0
      %v500 = vmax.f32 %v473, 0.0
      %v501 = vmax.f32 %v476, 0.0
      %v502 = vmax.f32 %v479, 0.0
      %v503 = vmax.f32 %v482, 0.0
      %v504 = vmax.f32 %v485, 0.0
      %v505 = vmax.f32 %v488, 0.0
      %v506 = vmul.f32 %v490, %v490
      %v507 = vmul.f32 %v491, %v491
      %v508 = vmul.f32 %v492, %v492
      %v509 = vmul.f32 %v493, %v493
      %v510 = vmul.f32 %v494, %v494
      %v511 = vmul.f32 %v495, %v495
      %v512 = vmul.f32 %v496, %v496
      %v513 = vmul.f32 %v497, %v497
      %v514 = vmul.f32 %v498, %v498
      %v515 = vmul.f32 %v499, %v499
      %v516 = vmul.f32 %v500, %v500
      %v517 = vmul.f32 %v501, %v501
      %v518 = vmul.f32 %v502, %v502
      %v519 = vmul.f32 %v503, %v503
      %v520 = vmul.f32 %v504, %v504
      %v521 = vmul.f32 %v505, %v505
      %522 = vadd.xlane.f32.xlu0 %v506
      %v523 = vpop.xlane.xlu0 %522
      %524 = vadd.xlane.f32.xlu0 %v507
      %v525 = vpop.xlane.xlu0 %524
      %526 = vadd.xlane.f32.xlu0 %v508
      %v527 = vpop.xlane.xlu0 %526
      %528 = vadd.xlane.f32.xlu0 %v509
      %v529 = vpop.xlane.xlu0 %528
      %530 = vadd.xlane.f32.xlu0 %v510
      %v531 = vpop.xlane.xlu0 %530
      %532 = vadd.xlane.f32.xlu0 %v511
      %v533 = vpop.xlane.xlu0 %532
      %534 = vadd.xlane.f32.xlu0 %v512
      %v535 = vpop.xlane.xlu0 %534
      %536 = vadd.xlane.f32.xlu0 %v513
      %v537 = vpop.xlane.xlu0 %536
      %538 = vadd.xlane.f32.xlu0 %v514
      %v539 = vpop.xlane.xlu0 %538
      %540 = vadd.xlane.f32.xlu0 %v515
      %v541 = vpop.xlane.xlu0 %540
      %542 = vadd.xlane.f32.xlu0 %v516
      %v543 = vpop.xlane.xlu0 %542
      %544 = vadd.xlane.f32.xlu0 %v517
      %v545 = vpop.xlane.xlu0 %544
      %546 = vadd.xlane.f32.xlu0 %v518
      %v547 = vpop.xlane.xlu0 %546
      %548 = vadd.xlane.f32.xlu0 %v519
      %v549 = vpop.xlane.xlu0 %548
      %550 = vadd.xlane.f32.xlu0 %v520
      %v551 = vpop.xlane.xlu0 %550
      %552 = vadd.xlane.f32.xlu0 %v521
      %v553 = vpop.xlane.xlu0 %552
      %v554 = vmax.f32 %v523, 1e-24
      %v555 = vmax.f32 %v525, 1e-24
      %v556 = vmax.f32 %v527, 1e-24
      %v557 = vmax.f32 %v529, 1e-24
      %v558 = vmax.f32 %v531, 1e-24
      %v559 = vmax.f32 %v533, 1e-24
      %v560 = vmax.f32 %v535, 1e-24
      %v561 = vmax.f32 %v537, 1e-24
      %v562 = vmax.f32 %v539, 1e-24
      %v563 = vmax.f32 %v541, 1e-24
      %v564 = vmax.f32 %v543, 1e-24
      %v565 = vmax.f32 %v545, 1e-24
      %v566 = vmax.f32 %v547, 1e-24
      %v567 = vmax.f32 %v549, 1e-24
      %v568 = vmax.f32 %v551, 1e-24
      %v569 = vmax.f32 %v553, 1e-24
      %v570 = vrsqrt.pop %v554
      %v571 = vmul.f32 %v570, %v554
      %v572 = vmul.f32 %v571, %v570
      %v573 = vmul.f32 0.5, %v572
      %v574 = vsub.f32 1.5, %v573
      %v575 = vmul.f32 %v570, %v574
      %vm576 = vweird.f32 %v554
      %vm577 = vweird.f32 %v570
      %vm578 = vmor %vm576, %vm577
      %v579 = vsel %vm578, %v570, %v575
      %v580 = vrsqrt.pop %v555
      %v581 = vmul.f32 %v580, %v555
      %v582 = vmul.f32 %v581, %v580
      %v583 = vmul.f32 0.5, %v582
      %v584 = vsub.f32 1.5, %v583
      %v585 = vmul.f32 %v580, %v584
      %vm586 = vweird.f32 %v555
      %vm587 = vweird.f32 %v580
      %vm588 = vmor %vm586, %vm587
      %v589 = vsel %vm588, %v580, %v585
      %v590 = vrsqrt.pop %v556
      %v591 = vmul.f32 %v590, %v556
      %v592 = vmul.f32 %v591, %v590
      %v593 = vmul.f32 0.5, %v592
      %v594 = vsub.f32 1.5, %v593
      %v595 = vmul.f32 %v590, %v594
      %vm596 = vweird.f32 %v556
      %vm597 = vweird.f32 %v590
      %vm598 = vmor %vm596, %vm597
      %v599 = vsel %vm598, %v590, %v595
      %v600 = vrsqrt.pop %v557
      %v601 = vmul.f32 %v600, %v557
      %v602 = vmul.f32 %v601, %v600
      %v603 = vmul.f32 0.5, %v602
      %v604 = vsub.f32 1.5, %v603
      %v605 = vmul.f32 %v600, %v604
      %vm606 = vweird.f32 %v557
      %vm607 = vweird.f32 %v600
      %vm608 = vmor %vm606, %vm607
      %v609 = vsel %vm608, %v600, %v605
      %v610 = vrsqrt.pop %v558
      %v611 = vmul.f32 %v610, %v558
      %v612 = vmul.f32 %v611, %v610
      %v613 = vmul.f32 0.5, %v612
      %v614 = vsub.f32 1.5, %v613
      %v615 = vmul.f32 %v610, %v614
      %vm616 = vweird.f32 %v558
      %vm617 = vweird.f32 %v610
      %vm618 = vmor %vm616, %vm617
      %v619 = vsel %vm618, %v610, %v615
      %v620 = vrsqrt.pop %v559
      %v621 = vmul.f32 %v620, %v559
      %v622 = vmul.f32 %v621, %v620
      %v623 = vmul.f32 0.5, %v622
      %v624 = vsub.f32 1.5, %v623
      %v625 = vmul.f32 %v620, %v624
      %vm626 = vweird.f32 %v559
      %vm627 = vweird.f32 %v620
      %vm628 = vmor %vm626, %vm627
      %v629 = vsel %vm628, %v620, %v625
      %v630 = vrsqrt.pop %v560
      %v631 = vmul.f32 %v630, %v560
      %v632 = vmul.f32 %v631, %v630
      %v633 = vmul.f32 0.5, %v632
      %v634 = vsub.f32 1.5, %v633
      %v635 = vmul.f32 %v630, %v634
      %vm636 = vweird.f32 %v560
      %vm637 = vweird.f32 %v630
      %vm638 = vmor %vm636, %vm637
      %v639 = vsel %vm638, %v630, %v635
      %v640 = vrsqrt.pop %v561
      %v641 = vmul.f32 %v640, %v561
      %v642 = vmul.f32 %v641, %v640
      %v643 = vmul.f32 0.5, %v642
      %v644 = vsub.f32 1.5, %v643
      %v645 = vmul.f32 %v640, %v644
      %vm646 = vweird.f32 %v561
      %vm647 = vweird.f32 %v640
      %vm648 = vmor %vm646, %vm647
      %v649 = vsel %vm648, %v640, %v645
      %v650 = vrsqrt.pop %v562
      %v651 = vmul.f32 %v650, %v562
      %v652 = vmul.f32 %v651, %v650
      %v653 = vmul.f32 0.5, %v652
      %v654 = vsub.f32 1.5, %v653
      %v655 = vmul.f32 %v650, %v654
      %vm656 = vweird.f32 %v562
      %vm657 = vweird.f32 %v650
      %vm658 = vmor %vm656, %vm657
      %v659 = vsel %vm658, %v650, %v655
      %v660 = vrsqrt.pop %v563
      %v661 = vmul.f32 %v660, %v563
      %v662 = vmul.f32 %v661, %v660
      %v663 = vmul.f32 0.5, %v662
      %v664 = vsub.f32 1.5, %v663
      %v665 = vmul.f32 %v660, %v664
      %vm666 = vweird.f32 %v563
      %vm667 = vweird.f32 %v660
      %vm668 = vmor %vm666, %vm667
      %v669 = vsel %vm668, %v660, %v665
      %v670 = vrsqrt.pop %v564
      %v671 = vmul.f32 %v670, %v564
      %v672 = vmul.f32 %v671, %v670
      %v673 = vmul.f32 0.5, %v672
      %v674 = vsub.f32 1.5, %v673
      %v675 = vmul.f32 %v670, %v674
      %vm676 = vweird.f32 %v564
      %vm677 = vweird.f32 %v670
      %vm678 = vmor %vm676, %vm677
      %v679 = vsel %vm678, %v670, %v675
      %v680 = vrsqrt.pop %v565
      %v681 = vmul.f32 %v680, %v565
      %v682 = vmul.f32 %v681, %v680
      %v683 = vmul.f32 0.5, %v682
      %v684 = vsub.f32 1.5, %v683
      %v685 = vmul.f32 %v680, %v684
      %vm686 = vweird.f32 %v565
      %vm687 = vweird.f32 %v680
      %vm688 = vmor %vm686, %vm687
      %v689 = vsel %vm688, %v680, %v685
      %v690 = vrsqrt.pop %v566
      %v691 = vmul.f32 %v690, %v566
      %v692 = vmul.f32 %v691, %v690
      %v693 = vmul.f32 0.5, %v692
      %v694 = vsub.f32 1.5, %v693
      %v695 = vmul.f32 %v690, %v694
      %vm696 = vweird.f32 %v566
      %vm697 = vweird.f32 %v690
      %vm698 = vmor %vm696, %vm697
      %v699 = vsel %vm698, %v690, %v695
      %v700 = vrsqrt.pop %v567
      %v701 = vmul.f32 %v700, %v567
      %v702 = vmul.f32 %v701, %v700
      %v703 = vmul.f32 0.5, %v702
      %v704 = vsub.f32 1.5, %v703
      %v705 = vmul.f32 %v700, %v704
      %vm706 = vweird.f32 %v567
      %vm707 = vweird.f32 %v700
      %vm708 = vmor %vm706, %vm707
      %v709 = vsel %vm708, %v700, %v705
      %v710 = vrsqrt.pop %v568
      %v711 = vmul.f32 %v710, %v568
      %v712 = vmul.f32 %v711, %v710
      %v713 = vmul.f32 0.5, %v712
      %v714 = vsub.f32 1.5, %v713
      %v715 = vmul.f32 %v710, %v714
      %vm716 = vweird.f32 %v568
      %vm717 = vweird.f32 %v710
      %vm718 = vmor %vm716, %vm717
      %v719 = vsel %vm718, %v710, %v715
      %v720 = vrsqrt.pop %v569
      %v721 = vmul.f32 %v720, %v569
      %v722 = vmul.f32 %v721, %v720
      %v723 = vmul.f32 0.5, %v722
      %v724 = vsub.f32 1.5, %v723
      %v725 = vmul.f32 %v720, %v724
      %vm726 = vweird.f32 %v569
      %vm727 = vweird.f32 %v720
      %vm728 = vmor %vm726, %vm727
      %v729 = vsel %vm728, %v720, %v725
      %v730 = vmul.f32 %v490, %v579
      %v731 = vmul.f32 %v491, %v589
      %v732 = vmul.f32 %v492, %v599
      %v733 = vmul.f32 %v493, %v609
      %v734 = vmul.f32 %v494, %v619
      %v735 = vmul.f32 %v495, %v629
      %v736 = vmul.f32 %v496, %v639
      %v737 = vmul.f32 %v497, %v649
      %v738 = vmul.f32 %v498, %v659
      %v739 = vmul.f32 %v499, %v669
      %v740 = vmul.f32 %v500, %v679
      %v741 = vmul.f32 %v501, %v689
      %v742 = vmul.f32 %v502, %v699
      %v743 = vmul.f32 %v503, %v709
      %v744 = vmul.f32 %v504, %v719
      %v745 = vmul.f32 %v505, %v729
      %746 = vst [vmem:[#allocation11] sm:$0xff] %v730
      %747 = vst [vmem:[#allocation11 + $0x8] sm:$0xff] %v731
      %748 = vst [vmem:[#allocation11 + $0x10] sm:$0xff] %v732
      %749 = vst [vmem:[#allocation11 + $0x18] sm:$0xff] %v733
      %750 = vst [vmem:[#allocation11 + $0x20] sm:$0xff] %v734
      %751 = vst [vmem:[#allocation11 + $0x28] sm:$0xff] %v735
      %752 = vst [vmem:[#allocation11 + $0x30] sm:$0xff] %v736
      %753 = vst [vmem:[#allocation11 + $0x38] sm:$0xff] %v737
      %754 = vst [vmem:[#allocation11 + $0x40] sm:$0xff] %v738
      %755 = vst [vmem:[#allocation11 + $0x48] sm:$0xff] %v739
      %756 = vst [vmem:[#allocation11 + $0x50] sm:$0xff] %v740
      %757 = vst [vmem:[#allocation11 + $0x58] sm:$0xff] %v741
      %758 = vst [vmem:[#allocation11 + $0x60] sm:$0xff] %v742
      %759 = vst [vmem:[#allocation11 + $0x68] sm:$0xff] %v743
      %760 = vst [vmem:[#allocation11 + $0x70] sm:$0xff] %v744
      %761 = vst [vmem:[#allocation11 + $0x78] sm:$0xff] %v745
    $region45: #{tpu_custom_call.1} parent=1 // pred_fallthru
      _
    // Predicated region
    $region46: #{tpu_custom_call.1} parent=1 // pred_check
      _
    $region47: #{tpu_custom_call.1} parent=1 // pred_check_branch
      %763 = sbr.rel (0) target = $region49
    $region48: #{tpu_custom_call.1} parent=1 // pred_region
      %765 = vsyncadd [#allocation5], 0
      %s766 = sshll.u32 [#allocation11], 4
      %s767 = int_to_ptr.vmem [resolvable:$true] %s766
      %s768 = sshll.u32 %s5, 4
      %s769 = int_to_ptr.hbm [resolvable:$true] %s768
      %774 = dma.vmem_to_hbm [thread:$0]  %s767, 2048, %s769, [#allocation5], 128, 128, 8
    $region49: #{tpu_custom_call.1} parent=1 // pred_fallthru
      _
    // Predicated region
    $region50: #{tpu_custom_call.1} parent=1 // pred_check
      _
    $region51: #{tpu_custom_call.1} parent=1 // pred_check_branch
      %776 = sbr.rel (0) target = $region53
    $region52: #{tpu_custom_call.1} parent=1 // pred_region
      %778 = dma.done [#allocation5], 2048
    $region53: #{tpu_custom_call.1} parent=1 // pred_fallthru
      _
    %779 = vsyncpa [#allocation4], 1
    %780 = vsyncpa [#allocation7], 1
    %781 = vsyncpa [#allocation10], 1
    %782 = vsyncpa [#allocation5], 1

</llo_original>
